<compile_context>
chip_gen: v7x
topology: tpu7x:2x2x1
jax: 0.10.0
libtpu: 0.0.40
codegen_flags: <defaults>
</compile_context>

<pallas_src>
import functools

import jax
import jax.numpy as jnp
from jax.experimental import pallas as pl
from jax.experimental.pallas import tpu as pltpu


def _round_up(x: int, m: int) -> int:
    return ((x + m - 1) // m) * m


def _is_v7x() -> bool:
    try:
        kind = jax.devices()[0].device_kind.lower()
        return ("v7" in kind) or ("tpu7" in kind)
    except Exception:
        return False


def _vmem_limit(needed_bytes: int, is_v7: bool) -> int:
    # v7x has 64 MiB physical VMEM (vs 128 MiB on v5e/v6e): keep headroom.
    budget = (48 << 20) if is_v7 else (100 << 20)
    return int(min(budget, max(32 << 20, needed_bytes)))


# --------------------------------------------------------------------------
# Kernel 1: cross-entropy partial sums over batch-row tiles.
# grid = (P, T); out block (1, 8, 128) per part; accumulator = SMEM f32 scalar.
# --------------------------------------------------------------------------
def _ce_partial_kernel(logits_ref, labels_ref, out_ref, acc_ref, *,
                       n_true, tiles_per_part, num_row_tiles, inv_n):
    p = pl.program_id(0)
    t = pl.program_id(1)
    tile_idx = p * tiles_per_part + t

    @pl.when(t == 0)
    def _init():
        acc_ref[0] = jnp.float32(0.0)

    @pl.when(tile_idx < num_row_tiles)          # skip redundant (clamped) steps
    def _accumulate():
        logits = logits_ref[...]                 # (tb, C), native dtype (bf16 stays bf16)
        labels = labels_ref[...]                 # (tb, 1), int32
        tb, c = logits.shape

        # Numerically stable per-row logsumexp. max / subtract / target-pick stay in
        # the native dtype; only exp/log/accumulation are f32.
        row_max = jnp.max(logits, axis=-1, keepdims=True)
        shifted = logits - row_max               # <= 0 per row, native dtype
        sumexp = jnp.sum(jnp.exp(shifted.astype(jnp.float32)),
                         axis=-1, keepdims=True)                     # (tb, 1) f32

        col_ids = jax.lax.broadcasted_iota(jnp.int32, (tb, c), 1)
        picked = jnp.sum(
            jnp.where(col_ids == labels, shifted, jnp.zeros_like(shifted)),
            axis=-1, keepdims=True).astype(jnp.float32)              # (tb, 1) f32

        # Only the per-row result is masked: padded rows of the ragged last tile produce
        # per-row garbage only (all reductions above are axis=-1), so no full-tile
        # pre-mask of the logits is needed.
        row_ids = tile_idx * tb + jax.lax.broadcasted_iota(jnp.int32, (tb, 1), 0)
        ce_rows = jnp.where(row_ids < n_true, jnp.log(sumexp) - picked, 0.0)

        acc_ref[0] += jnp.sum(ce_rows)

    @pl.when(t == pl.num_programs(1) - 1)
    def _finalize():
        partial = acc_ref[0] * inv_n             # this part's share of the mean
        out_ref[...] = jnp.full(out_ref.shape, partial, dtype=out_ref.dtype)


# --------------------------------------------------------------------------
# Kernel 2: elastic-net (delta_1*L1 + delta_2*L2) partial sums over weight tiles.
# grid = (P, T); out block (1, 8, 128) per part; single-vreg (8,128) accumulators.
# --------------------------------------------------------------------------
def _elasticnet_partial_kernel(w_ref, out_ref, l1_acc, l2_acc, *,
                               tiles_per_part, num_w_tiles, delta_1, delta_2):
    p = pl.program_id(0)
    t = pl.program_id(1)
    tile_idx = p * tiles_per_part + t

    @pl.when(t == 0)
    def _init():
        l1_acc[...] = jnp.zeros_like(l1_acc)
        l2_acc[...] = jnp.zeros_like(l2_acc)

    @pl.when(tile_idx < num_w_tiles)             # skip redundant (clamped) steps
    def _accumulate():
        w = w_ref[...].astype(jnp.float32)       # (tw, 128)
        tw = w.shape[0]
        # (tw,128) -> (tw//8, 8, 128) keeps the (8,128) minor tiles intact, so the
        # axis-0 sum is a chain of per-vreg VALU adds into one-vreg accumulators
        # (no cross-sublane/XLU reduce per step).
        w3 = w.reshape(tw // 8, 8, 128)
        l1_acc[...] += jnp.sum(jnp.abs(w3), axis=0)
        l2_acc[...] += jnp.sum(w3 * w3, axis=0)

    @pl.when(t == pl.num_programs(1) - 1)
    def _finalize():
        reg = delta_1 * jnp.sum(l1_acc[...]) + delta_2 * jnp.sum(l2_acc[...])
        out_ref[...] = jnp.full(out_ref.shape, reg, dtype=out_ref.dtype)


# --------------------------------------------------------------------------
# Wrapper
# --------------------------------------------------------------------------
def cross_entropy_elastic_net(prediction, label, model_weights_flat,
                              delta_1: float, delta_2: float, *,
                              block_rows: int | None = None,
                              weight_block_rows: int | None = None,
                              num_parts: int | None = None):
    """prediction: [N, C] (any float dtype), label: [N] int, weights: 1-D float."""
    n, c = prediction.shape
    labels_2d = label.reshape(n, 1).astype(jnp.int32)
    model_weights_flat = model_weights_flat.reshape(-1)
    delta_1 = float(delta_1)
    delta_2 = float(delta_2)

    is_v7 = _is_v7x()
    if num_parts is None:
        # Only v7x has 2 TensorCores; on v5e/v6e a >1 "parallel" axis is pure overhead.
        num_parts = 2 if is_v7 else 1
    dim_sem = ("parallel", "arbitrary")
    lanes = 128

    # ---------------- cross entropy over batch-row tiles ----------------
    pred_itemsize = jnp.dtype(prediction.dtype).itemsize
    if block_rows is None:
        # dtype-aware target: ~4 MiB native logits per step on v7x (64 MiB VMEM),
        # ~8 MiB on v5e/v6e; multi-MiB steps amortize ~0.35 us/step pipeline overhead.
        target = (4 << 20) if is_v7 else (8 << 20)
        block_rows = max(8, min(8192, target // max(1, c * pred_itemsize)))
    tb = max(8, (min(block_rows, _round_up(n, 8)) // 8) * 8)
    nb = pl.cdiv(n, tb)                       # total row tiles
    p_ce = max(1, min(num_parts, nb))         # parallel parts
    t_ce = pl.cdiv(nb, p_ce)                  # sequential tiles per part

    ce_kernel = functools.partial(
        _ce_partial_kernel, n_true=n, tiles_per_part=t_ce,
        num_row_tiles=nb, inv_n=1.0 / n)
    # Clamped trailing steps of the last part repeat the previous block index, so the
    # pipeline issues no redundant DMA; their compute is pl.when-skipped in-kernel.
    row_map = lambda p, t: (jnp.minimum(p * t_ce + t, nb - 1), 0)

    ce_need = (2 * tb * c * pred_itemsize      # logits, double buffered
               + 2 * tb * lanes * 4            # labels (lane-padded), double buffered
               + 4 * tb * c * 4                # f32 temporaries headroom
               + (2 << 20))
    ce_cost = pl.CostEstimate(
        flops=6 * n * c,
        transcendentals=n * c + n,
        bytes_accessed=n * c * pred_itemsize + n * 4 + p_ce * 8 * 128 * 4)

    ce_parts = pl.pallas_call(
        ce_kernel,
        out_shape=jax.ShapeDtypeStruct((p_ce, 8, 128), jnp.float32),
        grid=(p_ce, t_ce),
        in_specs=[pl.BlockSpec((tb, c), row_map),      # logits (native dtype)
                  pl.BlockSpec((tb, 1), row_map)],     # labels
        out_specs=pl.BlockSpec((1, 8, 128), lambda p, t: (p, 0, 0)),
        scratch_shapes=[pltpu.SMEM((1,), jnp.float32)],
        compiler_params=pltpu.CompilerParams(
            dimension_semantics=dim_sem,
            vmem_limit_bytes=_vmem_limit(ce_need, is_v7)),
        cost_estimate=ce_cost,
    )(prediction, labels_2d)
    ce = jnp.sum(ce_parts[:, 0, 0])

    # ---------------- elastic net over weight tiles ----------------
    wlen = model_weights_flat.shape[0]
    w_itemsize = jnp.dtype(model_weights_flat.dtype).itemsize
    if weight_block_rows is None:
        weight_block_rows = 4096              # 4096*128*4B = 2 MiB per f32 pipeline buffer
    rows = wlen // lanes                      # complete 128-lane rows available
    tw = max(8, (min(weight_block_rows, rows) // 8) * 8)
    nw = rows // tw                           # whole tiles streamed by the kernel
    kernel_elems = nw * tw * lanes

    reg = jnp.float32(0.0)
    if nw > 0:
        # No jnp.pad full copy: only whole [tw,128] tiles go to the kernel. When wlen
        # is a chunk multiple the reshape is a bitcast (zero copy).
        w2d = model_weights_flat[:kernel_elems].reshape(nw * tw, lanes)
        p_w = max(1, min(num_parts, nw))
        t_w = pl.cdiv(nw, p_w)

        en_kernel = functools.partial(
            _elasticnet_partial_kernel, tiles_per_part=t_w, num_w_tiles=nw,
            delta_1=delta_1, delta_2=delta_2)
        w_map = lambda p, t: (jnp.minimum(p * t_w + t, nw - 1), 0)

        en_need = 2 * tw * lanes * w_itemsize + tw * lanes * 4 + (2 << 20)
        en_cost = pl.CostEstimate(
            flops=4 * kernel_elems, transcendentals=0,
            bytes_accessed=kernel_elems * w_itemsize + p_w * 8 * 128 * 4)

        reg_parts = pl.pallas_call(
            en_kernel,
            out_shape=jax.ShapeDtypeStruct((p_w, 8, 128), jnp.float32),
            grid=(p_w, t_w),
            in_specs=[pl.BlockSpec((tw, lanes), w_map)],
            out_specs=pl.BlockSpec((1, 8, 128), lambda p, t: (p, 0, 0)),
            scratch_shapes=[pltpu.VMEM((8, lanes), jnp.float32),
                            pltpu.VMEM((8, lanes), jnp.float32)],
            compiler_params=pltpu.CompilerParams(
                dimension_semantics=dim_sem,
                vmem_limit_bytes=_vmem_limit(en_need, is_v7)),
            cost_estimate=en_cost,
        )(w2d)
        reg = reg + jnp.sum(reg_parts[:, 0, 0])

    # Ragged tail (< one tile): plain JAX, negligible bytes.
    if kernel_elems < wlen:
        tail = model_weights_flat[kernel_elems:].astype(jnp.float32)
        reg = reg + delta_1 * jnp.sum(jnp.abs(tail)) + delta_2 * jnp.sum(tail * tail)

    return ce + reg


if __name__ == "__main__":
    key = jax.random.PRNGKey(0)
    k_logits, k_labels, k_w1, k_w2 = jax.random.split(key, 4)

    # Small synthetic problem sized to exercise tiling, ragged masking and the
    # parallel-part split: batch=40, classes=32.
    N, C = 40, 32
    prediction = jax.random.normal(k_logits, (N, C), dtype=jnp.float32)
    label = jax.random.randint(k_labels, (N,), 0, C, dtype=jnp.int32)

    # Deterministic synthetic "model weights" (stand-in for model.get_model_weights()):
    # a linear layer weight (128, 64) and bias (64,), flattened and concatenated.
    w1 = jax.random.normal(k_w1, (128, 64), dtype=jnp.float32) * 0.1
    w2 = jax.random.normal(k_w2, (64,), dtype=jnp.float32) * 0.1
    model_weights_flat = jnp.concatenate([w1.reshape(-1), w2.reshape(-1)])

    delta_1, delta_2 = 0.01, 0.001

    loss = cross_entropy_elastic_net(prediction, label, model_weights_flat,
                                     delta_1, delta_2,
                                     block_rows=16, weight_block_rows=16)
    loss = jax.block_until_ready(loss)

    # Reference check in plain JAX.
    lse = jax.scipy.special.logsumexp(prediction, axis=-1)
    ce_ref = jnp.mean(lse - prediction[jnp.arange(N), label])
    ref = (ce_ref + delta_1 * jnp.sum(jnp.abs(model_weights_flat))
           + delta_2 * jnp.sum(jnp.square(model_weights_flat)))
    assert jnp.allclose(loss, ref, rtol=1e-5, atol=1e-5), (loss, ref)

    print("KERNEL_OK")
</pallas_src>

<mosaic_0001>
module attributes {stable_mosaic.version = 11 : i64} {
  func.func @_ce_partial_kernel(%arg0: i32, %arg1: i32, %arg2: memref<16x32xf32, #tpu.memory_space<vmem>>, %arg3: memref<16x1xi32, #tpu.memory_space<vmem>>, %arg4: memref<1x8x128xf32, #tpu.memory_space<vmem>>, %arg5: memref<1xf32, #tpu.memory_space<smem>>) attributes {dimension_semantics = [#tpu.dimension_semantics<parallel>, #tpu.dimension_semantics<arbitrary>], iteration_bounds = array<i64: 1, 3>, scalar_prefetch = 0 : i64, scratch_operands = 1 : i64, tpu.core_type = #tpu.core_type<tc>, window_params = [{transform_indices = @transform_0, window_bounds = array<i64: 16, 32>}, {transform_indices = @transform_1, window_bounds = array<i64: 16, 1>}, {transform_indices = @transform_2, window_bounds = array<i64: 1, 8, 128>}]} {
    %c3_i32 = arith.constant 3 : i32
    %0 = arith.muli %arg0, %c3_i32 : i32
    %1 = arith.addi %0, %arg1 : i32
    %c0_i32 = arith.constant 0 : i32
    %2 = arith.cmpi eq, %arg1, %c0_i32 : i32
    %3 = arith.extui %2 : i1 to i32
    %c0_i32_0 = arith.constant 0 : i32
    %4 = arith.cmpi ne, %3, %c0_i32_0 : i32
    scf.if %4 {
      %cst = arith.constant 0.000000e+00 : f32
      %c0 = arith.constant 0 : index
      %11 = memref.load %arg5[%c0] : memref<1xf32, #tpu.memory_space<smem>>
      memref.store %cst, %arg5[%c0] : memref<1xf32, #tpu.memory_space<smem>>
    } else {
    }
    %c3_i32_1 = arith.constant 3 : i32
    %5 = arith.cmpi slt, %1, %c3_i32_1 : i32
    %6 = arith.extui %5 : i1 to i32
    %c0_i32_2 = arith.constant 0 : i32
    %7 = arith.cmpi ne, %6, %c0_i32_2 : i32
    scf.if %7 {
      %c0 = arith.constant 0 : index
      %c0_4 = arith.constant 0 : index
      %11 = vector.load %arg2[%c0, %c0_4] : memref<16x32xf32, #tpu.memory_space<vmem>>, vector<16x32xf32>
      %c0_5 = arith.constant 0 : index
      %c0_6 = arith.constant 0 : index
      %12 = vector.load %arg3[%c0_5, %c0_6] : memref<16x1xi32, #tpu.memory_space<vmem>>, vector<16x1xi32>
      %cst = arith.constant dense<0xFF800000> : vector<16xf32>
      %13 = vector.multi_reduction <maximumf>, %11, %cst [1] : vector<16x32xf32> to vector<16xf32>
      %14 = vector.shape_cast %13 : vector<16xf32> to vector<16x1xf32>
      %15 = vector.broadcast %14 : vector<16x1xf32> to vector<16x32xf32>
      %16 = arith.subf %11, %15 : vector<16x32xf32>
      %17 = math.exp %16 : vector<16x32xf32>
      %cst_7 = arith.constant dense<0.000000e+00> : vector<16xf32>
      %18 = vector.multi_reduction <add>, %17, %cst_7 [1] : vector<16x32xf32> to vector<16xf32>
      %19 = vector.shape_cast %18 : vector<16xf32> to vector<16x1xf32>
      %20 = tpu.iota {dimensions = array<i32: 1>} : vector<16x32xi32>
      %21 = vector.broadcast %12 : vector<16x1xi32> to vector<16x32xi32>
      %22 = arith.cmpi eq, %20, %21 : vector<16x32xi32>
      %cst_8 = arith.constant 0.000000e+00 : f32
      %23 = vector.broadcast %cst_8 : f32 to vector<16x32xf32>
      %24 = arith.select %22, %16, %23 : vector<16x32xi1>, vector<16x32xf32>
      %cst_9 = arith.constant dense<0.000000e+00> : vector<16xf32>
      %25 = vector.multi_reduction <add>, %24, %cst_9 [1] : vector<16x32xf32> to vector<16xf32>
      %26 = vector.shape_cast %25 : vector<16xf32> to vector<16x1xf32>
      %c16_i32 = arith.constant 16 : i32
      %27 = arith.muli %1, %c16_i32 : i32
      %28 = tpu.iota {dimensions = array<i32: 0>} : vector<16x1xi32>
      %29 = vector.broadcast %27 : i32 to vector<16x1xi32>
      %30 = arith.addi %29, %28 : vector<16x1xi32>
      %c40_i32 = arith.constant 40 : i32
      %31 = vector.broadcast %c40_i32 : i32 to vector<16x1xi32>
      %32 = arith.cmpi slt, %30, %31 : vector<16x1xi32>
      %33 = math.log %19 : vector<16x1xf32>
      %34 = arith.subf %33, %26 : vector<16x1xf32>
      %cst_10 = arith.constant 0.000000e+00 : f32
      %35 = vector.broadcast %cst_10 : f32 to vector<16x1xf32>
      %36 = arith.select %32, %34, %35 : vector<16x1xi1>, vector<16x1xf32>
      %c0_11 = arith.constant 0 : index
      %37 = memref.load %arg5[%c0_11] : memref<1xf32, #tpu.memory_space<smem>>
      %38 = vector.shape_cast %36 : vector<16x1xf32> to vector<1x16x1xf32>
      %cst_12 = arith.constant dense<0.000000e+00> : vector<1xf32>
      %39 = vector.multi_reduction <add>, %38, %cst_12 [1, 2] : vector<1x16x1xf32> to vector<1xf32>
      %40 = vector.shape_cast %39 : vector<1xf32> to vector<1x1x1xf32>
      %41 = vector.extract %40[0, 0, 0] : f32 from vector<1x1x1xf32>
      %42 = arith.addf %37, %41 : f32
      %c0_13 = arith.constant 0 : index
      %43 = memref.load %arg5[%c0_13] : memref<1xf32, #tpu.memory_space<smem>>
      memref.store %42, %arg5[%c0_13] : memref<1xf32, #tpu.memory_space<smem>>
    } else {
    }
    %c2_i32 = arith.constant 2 : i32
    %8 = arith.cmpi eq, %arg1, %c2_i32 : i32
    %9 = arith.extui %8 : i1 to i32
    %c0_i32_3 = arith.constant 0 : i32
    %10 = arith.cmpi ne, %9, %c0_i32_3 : i32
    scf.if %10 {
      %c0 = arith.constant 0 : index
      %11 = memref.load %arg5[%c0] : memref<1xf32, #tpu.memory_space<smem>>
      %cst = arith.constant 2.500000e-02 : f32
      %12 = arith.mulf %11, %cst : f32
      %13 = vector.broadcast %12 : f32 to vector<1x8x128xf32>
      %c0_4 = arith.constant 0 : index
      %c0_5 = arith.constant 0 : index
      %c0_6 = arith.constant 0 : index
      %14 = vector.load %arg4[%c0_4, %c0_5, %c0_6] : memref<1x8x128xf32, #tpu.memory_space<vmem>>, vector<1x8x128xf32>
      tpu.vector_store %arg4[%c0_4, %c0_5, %c0_6], %13 {strides = array<i32>} : memref<1x8x128xf32, #tpu.memory_space<vmem>>, vector<1x8x128xf32>,
    } else {
    }
    return
  }
  func.func @transform_0(%arg0: i32, %arg1: i32) -> (i32, i32) {
    %c3_i32 = arith.constant 3 : i32
    %0 = arith.muli %arg0, %c3_i32 : i32
    %1 = arith.addi %0, %arg1 : i32
    %c2_i32 = arith.constant 2 : i32
    %2 = arith.minsi %1, %c2_i32 : i32
    %c0_i32 = arith.constant 0 : i32
    %c0_i32_0 = arith.constant 0 : i32
    return %2, %c0_i32 : i32, i32
  }
  func.func @transform_1(%arg0: i32, %arg1: i32) -> (i32, i32) {
    %c3_i32 = arith.constant 3 : i32
    %0 = arith.muli %arg0, %c3_i32 : i32
    %1 = arith.addi %0, %arg1 : i32
    %c2_i32 = arith.constant 2 : i32
    %2 = arith.minsi %1, %c2_i32 : i32
    %c0_i32 = arith.constant 0 : i32
    %c0_i32_0 = arith.constant 0 : i32
    return %2, %c0_i32 : i32, i32
  }
  func.func @transform_2(%arg0: i32, %arg1: i32) -> (i32, i32, i32) {
    %c0_i32 = arith.constant 0 : i32
    %c0_i32_0 = arith.constant 0 : i32
    %c0_i32_1 = arith.constant 0 : i32
    return %arg0, %c0_i32, %c0_i32_0 : i32, i32, i32
  }
}

</mosaic_0001>

<llo_original>
// kernel: tpu_custom_call.1
$region0: #{tpu_custom_call.1}
  #allocation0 [shape = 'u32[]', space=smem, size = 0x4, offset = 0x4, fixed_abs, tag = 'smem constant byte address 0x4 - core index']
  #allocation1 [shape = 'u32[144,128]{1,0:T(1,128)}', space=vmem, size = 0x12000, scoped, tag = 'internal scratch']
  #allocation2 [shape = 'f32[1]{0:T(128)}', space=smem, size = 0x200, scoped, tag = 'scratch operand']
  %s0 = inlined_call_operand.vmem [shape: f32[40,32], index: 0, kind: input, shape index: {}]
  %s1 = inlined_call_operand.vmem [shape: s32[40,1], index: 1, kind: input, shape index: {}]
  %s2 = inlined_call_operand.hbm [shape: f32[1,8,128], index: 2, kind: output, shape index: {}]
  %s3 = sld [smem:[#allocation0]]
  $region53: #{tpu_custom_call.1} parent=0
    _
  %s5 = ssub.s32 1, %s3
  %s6 = scalar_select 0, %s5, %s3
  $region1: #{tpu_custom_call.1} parent=0
    #allocation3 [shape = 'u8[4096]{0}', space=vmem, size = 0x1000, scoped, tag = 'output window, operand 0, single buffered']
    #allocation4 [shape = 's32[2]{0}', space=sflag, size = 0x8, scoped, tag = 'scoped memory for tpu_custom_call.1']
    %7 = vsyncpa [#allocation4], 0
    loop: start=0, step=1, limit=5
    $region2: #{tpu_custom_call.1} parent=1 // loop_pre_header
      _
    $region3: #{tpu_custom_call.1} parent=1 // loop_header
      %s9 = sphi 0, %s13
      %p10 = scmp.ge.s32.totalorder %s9, 5
      %s16 = sphi 0, %s28
      %s17 = sphi 0, %s24
      %s18 = sphi 0, %s16
      %s19 = sphi 0, %s17
      %s20 = sphi 0, %s18
      %s21 = sphi 0, %s19
      %s39 = sphi 0, %s41
      %s42 = sphi 0, %s39
      %s43 = sphi 0, %s42
      %s59 = sphi 0, %s43
      %s73 = sphi 0, %s75
      %s76 = sphi 0, %s73
      %s77 = sphi 0, %s76
      %s93 = sphi 0, %s77
      %s99 = sphi 0, %s101
      %s102 = sphi 0, %s99
      %s103 = sphi 0, %s102
      %s119 = sphi 0, %s103
    $region4: #{tpu_custom_call.1} parent=1 // loop_header_branch
      %12 = sbr.rel (%p10) target = $region8
    $region5: #{tpu_custom_call.1} parent=1 // loop_body
      %s14 = ssub.s32 %s9, 1
      %s15 = ssub.s32 %s9, 2
      %s22 = sadd.s32 1, %s17
      %p23 = scmp.ge.s32.totalorder %s22, 3
      %s24 = scalar_select %p23, 0, %s22
      %s25 = sadd.s32 1, %s16
      %s26 = scalar_select %p23, %s25, %s16
      %p27 = scmp.ge.s32.totalorder %s26, 1
      %s28 = scalar_select %p27, 0, %s26
      %s29 = smul.u32 %s16, 3
      %s30 = sadd.s32 %s29, %s17
      %p31 = scmp.lt.s32.totalorder %s30, 2
      %s32 = scalar_select %p31, %s30, 2
      %s33 = smul.u32 %s28, 3
      %s34 = sadd.s32 %s33, %s24
      %p35 = scmp.lt.s32.totalorder %s34, 2
      %s36 = scalar_select %p35, %s34, 2
      %s37 = ssub.s32 %s32, %s36
      %p38 = scmp.eq.s32.totalorder %s37, 0
      %s40 = sadd.s32 %s39, 1
      %s41 = scalar_select %p38, %s39, %s40
      %p44 = pneg %p38
      %p45 = scmp.eq.s32.totalorder %s9, 2
      %p46 = por %p44, %p45
      %p47 = scmp.ne.s32.totalorder %s39, %s42
      %p48 = scmp.eq.s32.totalorder %s9, 0
      %p49 = por %p47, %p48
      %p50 = scmp.ne.s32.totalorder %s39, %s42
      %p51 = scmp.eq.s32.totalorder %s14, 2
      %p52 = por %p50, %p51
      %p53 = scmp.ne.s32.totalorder %s42, %s43
      %p54 = scmp.eq.s32.totalorder %s14, 0
      %p55 = por %p53, %p54
      %p56 = scmp.ne.s32.totalorder %s42, %s43
      %p57 = scmp.eq.s32.totalorder %s15, 2
      %p58 = por %p56, %p57
      %p60 = scmp.ne.s32.totalorder %s43, %s59
      %p61 = scmp.eq.s32.totalorder %s15, 0
      %p62 = por %p60, %p61
      %s63 = smul.u32 %s16, 3
      %s64 = sadd.s32 %s63, %s17
      %p65 = scmp.lt.s32.totalorder %s64, 2
      %s66 = scalar_select %p65, %s64, 2
      %s67 = smul.u32 %s28, 3
      %s68 = sadd.s32 %s67, %s24
      %p69 = scmp.lt.s32.totalorder %s68, 2
      %s70 = scalar_select %p69, %s68, 2
      %s71 = ssub.s32 %s66, %s70
      %p72 = scmp.eq.s32.totalorder %s71, 0
      %s74 = sadd.s32 %s73, 1
      %s75 = scalar_select %p72, %s73, %s74
      %p78 = pneg %p72
      %p79 = scmp.eq.s32.totalorder %s9, 2
      %p80 = por %p78, %p79
      %p81 = scmp.ne.s32.totalorder %s73, %s76
      %p82 = scmp.eq.s32.totalorder %s9, 0
      %p83 = por %p81, %p82
      %p84 = scmp.ne.s32.totalorder %s73, %s76
      %p85 = scmp.eq.s32.totalorder %s14, 2
      %p86 = por %p84, %p85
      %p87 = scmp.ne.s32.totalorder %s76, %s77
      %p88 = scmp.eq.s32.totalorder %s14, 0
      %p89 = por %p87, %p88
      %p90 = scmp.ne.s32.totalorder %s76, %s77
      %p91 = scmp.eq.s32.totalorder %s15, 2
      %p92 = por %p90, %p91
      %p94 = scmp.ne.s32.totalorder %s77, %s93
      %p95 = scmp.eq.s32.totalorder %s15, 0
      %p96 = por %p94, %p95
      %s97 = ssub.s32 %s16, %s28
      %p98 = scmp.eq.s32.totalorder %s97, 0
      %s100 = sadd.s32 %s99, 1
      %s101 = scalar_select %p98, %s99, %s100
      %p104 = pneg %p98
      %p105 = scmp.eq.s32.totalorder %s9, 2
      %p106 = por %p104, %p105
      %p107 = scmp.ne.s32.totalorder %s99, %s102
      %p108 = scmp.eq.s32.totalorder %s9, 0
      %p109 = por %p107, %p108
      %p110 = scmp.ne.s32.totalorder %s99, %s102
      %p111 = scmp.eq.s32.totalorder %s14, 2
      %p112 = por %p110, %p111
      %p113 = scmp.ne.s32.totalorder %s102, %s103
      %p114 = scmp.eq.s32.totalorder %s14, 0
      %p115 = por %p113, %p114
      %p116 = scmp.ne.s32.totalorder %s102, %s103
      %p117 = scmp.eq.s32.totalorder %s15, 2
      %p118 = por %p116, %p117
      %p120 = scmp.ne.s32.totalorder %s103, %s119
      %p121 = scmp.eq.s32.totalorder %s15, 0
      %p122 = por %p120, %p121
      %p123 = scmp.le.s32.totalorder 1, %s9
      %p124 = scmp.lt.s32.totalorder %s9, 4
      %p125 = pnand %p123, %p124
      %p126 = pneg %p125
      // Predicated region
      $region9: #{tpu_custom_call.1} parent=5 // pred_check
        _
      $region10: #{tpu_custom_call.1} parent=5 // pred_check_branch
        %128 = sbr.rel (%p125) target = $region12
      $region11: #{tpu_custom_call.1} parent=5 // pred_region
        %s129 = ssub.s32 %s9, 1
      $region12: #{tpu_custom_call.1} parent=5 // pred_fallthru
        _
      %p130 = scmp.lt.s32.totalorder %s9, 3
      // Predicated region
      $region13: #{tpu_custom_call.1} parent=5 // pred_check
        %p131 = pneg %p130
      $region14: #{tpu_custom_call.1} parent=5 // pred_check_branch
        %133 = sbr.rel (%p131) target = $region16
      $region15: #{tpu_custom_call.1} parent=5 // pred_region
        // Predicated region
        $region17: #{tpu_custom_call.1} parent=15 // pred_check
          %p134 = pneg %p49
        $region18: #{tpu_custom_call.1} parent=15 // pred_check_branch
          %136 = sbr.rel (%p134) target = $region20
        $region19: #{tpu_custom_call.1} parent=15 // pred_region
          %s137 = smul.u32 %s16, 3
          %s138 = sadd.s32 %s137, %s17
          %p139 = scmp.lt.s32.totalorder %s138, 2
          %s140 = scalar_select %p139, %s138, 2
          %s141 = smul.u32 2, %s140
          %s142 = ssub.s32 5, %s141
          %p143 = scmp.lt.s32.totalorder %s142, 2
          %s144 = scalar_select %p143, %s142, 2
          %s145 = smul.u32 128, %s144
          %p146 = scmp.lt.s32.totalorder %s141, 4
          %s147 = scalar_select %p146, %s141, 4
          %s148 = smul.addr %s147, 8
          %s149 = scalar_lea.vmem %s0, %s148
          %s150 = smul.u32 %s16, 3
          %s151 = sadd.s32 %s150, %s17
          %p152 = scmp.lt.s32.totalorder %s151, 2
          %s153 = scalar_select %p152, %s151, 2
          %s154 = smul.u32 2, %s153
          %s155 = ssub.s32 5, %s154
          %p156 = scmp.lt.s32.totalorder %s155, 2
          %s157 = scalar_select %p156, %s155, 2
          %s158 = smul.u32 128, %s157
        $region20: #{tpu_custom_call.1} parent=15 // pred_fallthru
          _
        // Predicated region
        $region21: #{tpu_custom_call.1} parent=15 // pred_check
          %p159 = pneg %p83
        $region22: #{tpu_custom_call.1} parent=15 // pred_check_branch
          %161 = sbr.rel (%p159) target = $region24
        $region23: #{tpu_custom_call.1} parent=15 // pred_region
          %s162 = smul.u32 %s16, 3
          %s163 = sadd.s32 %s162, %s17
          %p164 = scmp.lt.s32.totalorder %s163, 2
          %s165 = scalar_select %p164, %s163, 2
          %s166 = smul.u32 2, %s165
          %s167 = ssub.s32 5, %s166
          %p168 = scmp.lt.s32.totalorder %s167, 2
          %s169 = scalar_select %p168, %s167, 2
          %s170 = smul.u32 128, %s169
          %p171 = scmp.lt.s32.totalorder %s166, 4
          %s172 = scalar_select %p171, %s166, 4
          %s173 = smul.addr %s172, 8
          %s174 = scalar_lea.vmem %s1, %s173
          %s175 = smul.u32 %s16, 3
          %s176 = sadd.s32 %s175, %s17
          %p177 = scmp.lt.s32.totalorder %s176, 2
          %s178 = scalar_select %p177, %s176, 2
          %s179 = smul.u32 2, %s178
          %s180 = ssub.s32 5, %s179
          %p181 = scmp.lt.s32.totalorder %s180, 2
          %s182 = scalar_select %p181, %s180, 2
          %s183 = smul.u32 128, %s182
        $region24: #{tpu_custom_call.1} parent=15 // pred_fallthru
          _
      $region16: #{tpu_custom_call.1} parent=5 // pred_fallthru
        _
      %p184 = scmp.le.s32.totalorder 1, %s9
      %p185 = scmp.lt.s32.totalorder %s9, 4
      %p186 = pnand %p184, %p185
      %p187 = pneg %p186
      // Predicated region
      $region25: #{tpu_custom_call.1} parent=5 // pred_check
        _
      $region26: #{tpu_custom_call.1} parent=5 // pred_check_branch
        %189 = sbr.rel (%p186) target = $region28
      $region27: #{tpu_custom_call.1} parent=5 // pred_region
        %s190 = ssub.s32 %s9, 1
        %s191 = smul.u32 %s18, 3
        %s192 = sadd.s32 %s191, %s19
        %p193 = scmp.lt.s32.totalorder %s192, 2
        %s194 = scalar_select %p193, %s192, 2
        %s195 = smul.u32 2, %s194
        %s196 = ssub.s32 5, %s195
        %p197 = scmp.lt.s32.totalorder %s196, 2
        %s198 = scalar_select %p197, %s196, 2
        %s199 = smul.u32 128, %s198
        %p200 = scmp.lt.s32.totalorder %s195, 4
        %s201 = scalar_select %p200, %s195, 4
        %s202 = smul.addr %s201, 8
        %s203 = scalar_lea.vmem %s0, %s202
        %p204 = pneg %p55
        %p205 = pneg %p52
        %s206 = smul.u32 %s18, 3
        %s207 = sadd.s32 %s206, %s19
        %p208 = scmp.lt.s32.totalorder %s207, 2
        %s209 = scalar_select %p208, %s207, 2
        %s210 = smul.u32 2, %s209
        %s211 = ssub.s32 5, %s210
        %p212 = scmp.lt.s32.totalorder %s211, 2
        %s213 = scalar_select %p212, %s211, 2
        %s214 = smul.u32 128, %s213
        %p215 = scmp.lt.s32.totalorder %s210, 4
        %s216 = scalar_select %p215, %s210, 4
        %s217 = smul.addr %s216, 8
        %s218 = scalar_lea.vmem %s1, %s217
        %p219 = pneg %p89
        %p220 = pneg %p86
        %p221 = pneg %p115
        %p222 = pneg %p112
        %s223 = smul.u32 %s18, 3
        %s224 = sadd.s32 %s223, %s19
        %p225 = scmp.lt.s32.totalorder %s224, 2
        %s226 = scalar_select %p225, %s224, 2
        %s227 = smul.u32 2, %s226
        %s228 = ssub.s32 5, %s227
        %p229 = scmp.lt.s32.totalorder %s228, 2
        %s230 = scalar_select %p229, %s228, 2
        %s231 = smul.u32 128, %s230
        %p232 = scmp.lt.s32.totalorder %s227, 4
        %s233 = scalar_select %p232, %s227, 4
        %s234 = smul.addr %s233, 8
        %s235 = scalar_lea.vmem %s0, %s234
        %s236 = smul.u32 %s18, 3
        %s237 = sadd.s32 %s236, %s19
        %p238 = scmp.lt.s32.totalorder %s237, 2
        %s239 = scalar_select %p238, %s237, 2
        %s240 = smul.u32 2, %s239
        %s241 = ssub.s32 5, %s240
        %p242 = scmp.lt.s32.totalorder %s241, 2
        %s243 = scalar_select %p242, %s241, 2
        %s244 = smul.u32 128, %s243
        %s245 = smul.u32 %s18, 3
        %s246 = sadd.s32 %s245, %s19
        %p247 = scmp.lt.s32.totalorder %s246, 2
        %s248 = scalar_select %p247, %s246, 2
        %s249 = smul.u32 2, %s248
        %s250 = ssub.s32 5, %s249
        %p251 = scmp.lt.s32.totalorder %s250, 2
        %s252 = scalar_select %p251, %s250, 2
        %s253 = smul.u32 128, %s252
        %p254 = scmp.lt.s32.totalorder %s249, 4
        %s255 = scalar_select %p254, %s249, 4
        %s256 = smul.addr %s255, 8
        %s257 = scalar_lea.vmem %s1, %s256
        %s258 = smul.u32 %s18, 3
        %s259 = sadd.s32 %s258, %s19
        %p260 = scmp.lt.s32.totalorder %s259, 2
        %s261 = scalar_select %p260, %s259, 2
        %s262 = smul.u32 2, %s261
        %s263 = ssub.s32 5, %s262
        %p264 = scmp.lt.s32.totalorder %s263, 2
        %s265 = scalar_select %p264, %s263, 2
        %s266 = smul.u32 128, %s265
        %s267 = smul.u32 %s18, 3
        %s268 = sadd.s32 %s267, %s19
        %p269 = scmp.eq.s32.totalorder %s19, 0
        // Predicated region
        $region29: #{tpu_custom_call.1} parent=27 // pred_check
          %p270 = pneg %p269
        $region30: #{tpu_custom_call.1} parent=27 // pred_check_branch
          %272 = sbr.rel (%p270) target = $region32
        $region31: #{tpu_custom_call.1} parent=27 // pred_region
          %s273 = scalar_lea.smem [#allocation2], 0
          %274 = sst [smem:[%s273]] 0.0
        $region32: #{tpu_custom_call.1} parent=27 // pred_fallthru
          _
        %p275 = scmp.lt.s32.totalorder %s268, 3
        // Predicated region
        $region33: #{tpu_custom_call.1} parent=27 // pred_check
          %p276 = pneg %p275
        $region34: #{tpu_custom_call.1} parent=27 // pred_check_branch
          %278 = sbr.rel (%p276) target = $region36
        $region35: #{tpu_custom_call.1} parent=27 // pred_region
          %v279 = vld [vmem:[%s235] sm:$0xff]
          %v280 = vld [vmem:[%s235 + $0x8] sm:$0xff]
          %v281 = vld [vmem:[%s257] sm:$0xff]
          %v282 = vld [vmem:[%s257 + $0x8] sm:$0xff]
          %vm283 = vcmask 261120
          %v284 = vsel %vm283, %v279, -inf
          %285 = vmax.xlane.f32.xlu0 %v284
          %v286 = vpop.xlane.xlu0 %285
          %v287 = vsel %vm283, %v280, -inf
          %288 = vmax.xlane.f32.xlu0 %v287
          %v289 = vpop.xlane.xlu0 %288
          %v290 = vsub.f32 %v279, %v286
          %v291 = vsub.f32 %v280, %v289
          %v292 = vmul.f32 %v290, 1.442695
          %v293 = vpow.pop %v292
          %v294 = vmul.f32 %v291, 1.442695
          %v295 = vpow.pop %v294
          %v296 = vsel %vm283, %v293, 0.0
          %297 = vadd.xlane.f32.xlu0 %v296
          %v298 = vpop.xlane.xlu0 %297
          %v299 = vsel %vm283, %v295, 0.0
          %300 = vadd.xlane.f32.xlu0 %v299
          %v301 = vpop.xlane.xlu0 %300
          %v302 = vlaneseq
          %v303 = vand.u32 %v302, 127
          %304 = vset.pattern.permute.xlu0 0
          %305 = vperm.xlu0 %304, %v281
          %v306 = vpop.permute.xlu0 %305
          %307 = vset.pattern.permute.xlu0 0
          %308 = vperm.xlu0 %307, %v282
          %v309 = vpop.permute.xlu0 %308
          %vm310 = vcmp.eq.s32.totalorder %v303, %v306
          %vm311 = vcmp.eq.s32.totalorder %v303, %v309
          %v312 = vsel %vm310, %v290, 0.0
          %v313 = vsel %vm311, %v291, 0.0
          %v314 = vsel %vm283, %v312, 0.0
          %315 = vadd.xlane.f32.xlu0 %v314
          %v316 = vpop.xlane.xlu0 %315
          %v317 = vsel %vm283, %v313, 0.0
          %318 = vadd.xlane.f32.xlu0 %v317
          %v319 = vpop.xlane.xlu0 %318
          %s320 = smul.u32 %s268, 16
          %v321 = vlaneseq
          %v322 = vshrl.u32 %v321, 7
          %v323 = vadd.s32 %v322, 8
          %v324 = vstv %s320
          %v325 = vadd.s32 %v324, %v322
          %v326 = vadd.s32 %v324, %v323
          %vm327 = vcmp.lt.s32.totalorder %v325, 40
          %vm328 = vcmp.lt.s32.totalorder %v326, 40
          %v329 = vlog2.pop %v298
          %v330 = vmul.f32 %v329, 0.6931472
          %v331 = vlog2.pop %v301
          %v332 = vmul.f32 %v331, 0.6931472
          %v333 = vsub.f32 %v330, %v316
          %v334 = vsub.f32 %v332, %v319
          %v335 = vsel %vm327, %v333, 0.0
          %v336 = vsel %vm328, %v334, 0.0
          %s337 = sld [smem:[#allocation2]]
          %vm338 = vcmask 7168
          %v339 = vsel %vm338, %v335, 0.0
          %v340 = vsel %vm338, %v336, 0.0
          %v341 = vadd.f32 %v339, %v340
          %342 = vadd.xlane.f32.xlu0 %v341
          %v343 = vpop.xlane.xlu0 %342
          %v344 = vrot.slane %v343, 4
          %v345 = vadd.f32 %v343, %v344
          %v346 = vrot.slane %v345, 2
          %v347 = vadd.f32 %v345, %v346
          %v348 = vrot.slane %v347, 1
          %v349 = vadd.f32 %v347, %v348
          %s350 = vtos %v349
          %s351 = sadd.f32 %s337, %s350
          %s352 = scalar_lea.smem [#allocation2], 0
          %353 = sst [smem:[%s352]] %s351
        $region36: #{tpu_custom_call.1} parent=27 // pred_fallthru
          _
        %p354 = scmp.eq.s32.totalorder %s19, 2
        // Predicated region
        $region37: #{tpu_custom_call.1} parent=27 // pred_check
          %p355 = pneg %p354
        $region38: #{tpu_custom_call.1} parent=27 // pred_check_branch
          %357 = sbr.rel (%p355) target = $region40
        $region39: #{tpu_custom_call.1} parent=27 // pred_region
          %s358 = sld [smem:[#allocation2]]
          %s359 = smul.f32 %s358, 0.025
          %v360 = vstv %s359
          %361 = vst [vmem:[#allocation3] sm:$0xff] %v360
        $region40: #{tpu_custom_call.1} parent=27 // pred_fallthru
          _
        // Predicated region
        $region41: #{tpu_custom_call.1} parent=27 // pred_check
          %p362 = pneg %p112
        $region42: #{tpu_custom_call.1} parent=27 // pred_check_branch
          %364 = sbr.rel (%p362) target = $region44
        $region43: #{tpu_custom_call.1} parent=27 // pred_region
          %s366 = ssub.s32 128, 128
          %367 = vsyncadd [#allocation4], %s366
          %s368 = smul.addr %s18, 128
          %s369 = scalar_lea.hbm %s2, %s368
          %s371 = sshll.u32 [#allocation3], 4
          %s372 = int_to_ptr.vmem [resolvable:$true] %s371
          %374 = dma.vmem_to_hbm [thread:$0]  %s372, 128, %s369, [#allocation4]
        $region44: #{tpu_custom_call.1} parent=27 // pred_fallthru
          _
        // Predicated region
        $region45: #{tpu_custom_call.1} parent=27 // pred_check
          %p375 = pneg %p112
        $region46: #{tpu_custom_call.1} parent=27 // pred_check_branch
          %377 = sbr.rel (%p375) target = $region48
        $region47: #{tpu_custom_call.1} parent=27 // pred_region
          %378 = dma.done [#allocation4], 128
        $region48: #{tpu_custom_call.1} parent=27 // pred_fallthru
          _
      $region28: #{tpu_custom_call.1} parent=5 // pred_fallthru
        _
      %p379 = scmp.le.s32.totalorder 2, %s9
      // Predicated region
      $region49: #{tpu_custom_call.1} parent=5 // pred_check
        %p380 = pneg %p379
      $region50: #{tpu_custom_call.1} parent=5 // pred_check_branch
        %382 = sbr.rel (%p380) target = $region52
      $region51: #{tpu_custom_call.1} parent=5 // pred_region
        %s383 = ssub.s32 %s9, 2
      $region52: #{tpu_custom_call.1} parent=5 // pred_fallthru
        _
    $region6: #{tpu_custom_call.1} parent=1 // loop_footer
      %s13 = sadd.s32 1, %s9
    $region7: #{tpu_custom_call.1} parent=1 // loop_footer_branch
      %8 = sbr.rel target = $region3
    $region8: #{tpu_custom_call.1} parent=1 // loop_exit
      _
    %384 = vsyncpa [#allocation4], 1
    %s385 = scalar_lea.sflag [#allocation4], 1
    %386 = vsyncpa %s385, 1

</llo_original>
